<compile_context>
chip_gen: v6e
topology: v6e:2x2x1
jax: 0.10.0
libtpu: 0.0.40
codegen_flags: <defaults>
</compile_context>

<pallas_src>
import jax
import jax.numpy as jnp
from jax.experimental import pallas as pl
from jax.experimental.pallas import tpu as pltpu


def _round_up(x, m):
    return (x + m - 1) // m * m


_VMEM_SOFT_CAP = 44 * 1024 * 1024      # stay well under v7x's 64 MiB physical VMEM


def _vmem_estimate(tm, d, c_pad, w_bpe):
    """Conservative VMEM bytes for the resident-weight layout."""
    return (2 * tm * d * 4             # double-buffered f32 x tiles
            + 2 * d * c_pad * w_bpe    # fused weight (2 buffers, fetched once)
            + 2 * 8 * c_pad * 4        # bias block (padded to one sublane tile)
            + 2 * tm * c_pad * 4)      # double-buffered f32 output tiles


# ---------------------------------------------------------------------------
# Kernel: one M tile per grid step.  Fused weight + bias are VMEM-resident,
# so there is no K axis, no accumulator scratch and no init/finalize phase.
# The f32 x tile is cast to the weight dtype in-register (no HBM pre-pass);
# accumulation is f32 on the MXU via preferred_element_type.
# ---------------------------------------------------------------------------
def _bbox_head_fused_kernel(x_ref, w_ref, b_ref, out_ref):
    x = x_ref[...].astype(w_ref.dtype)
    acc = jnp.dot(x, w_ref[...], preferred_element_type=jnp.float32)
    out_ref[...] = (acc + b_ref[...]).astype(out_ref.dtype)


def fuse_bbox_head_params(params, *, with_cls=True, with_reg=True,
                          compute_dtype=jnp.bfloat16):
    """Fuse fc_cls / fc_reg into one lane-dense (D, c_pad) weight + (1, c_pad) bias.

    Run this ONCE per weight update (hoisted out of the forward pass on
    purpose): concatenate the enabled heads, transpose to (D, C_total), pad
    the fused out-dim to a multiple of 128 lanes (full-width vst) and cast to
    `compute_dtype`.
    """
    assert with_cls or with_reg
    parts_w, parts_b, widths = [], [], []
    if with_cls:
        parts_w.append(params["w_cls"]); parts_b.append(params["b_cls"])
        widths.append(params["w_cls"].shape[0])
    if with_reg:
        parts_w.append(params["w_reg"]); parts_b.append(params["b_reg"])
        widths.append(params["w_reg"].shape[0])

    w_fused = jnp.concatenate(parts_w, axis=0).T          # (D, C_total)
    b_fused = jnp.concatenate(parts_b, axis=0)            # (C_total,)
    d, c_total = w_fused.shape

    # Keep c_pad at 128: the kernel is HBM-bound, so padding to the 256-wide
    # MXU of v6e/v7x would only add weight/output traffic for zero benefit.
    c_pad = max(128, _round_up(c_total, 128))
    w_p = jnp.zeros((d, c_pad), compute_dtype).at[:, :c_total].set(
        w_fused.astype(compute_dtype))
    b_p = jnp.zeros((1, c_pad), jnp.float32).at[0, :c_total].set(
        b_fused.astype(jnp.float32))
    return {
        "w": w_p,                      # (D, c_pad) compute_dtype
        "b": b_p,                      # (1, c_pad) f32
        "widths": tuple(widths),
        "with_cls": with_cls,
        "with_reg": with_reg,
    }


def _pick_tm(n, d, c_pad, w_bpe, tm):
    if tm is None:
        if n >= 512:
            tm = 256
        elif n >= 32:
            # Aim for >= 2 M tiles so both v7x TensorCores get work.
            tm = max(16, min(256, _round_up((n + 1) // 2, 16)))
        else:
            # x / out tiles are f32, so 8-row sublane granularity is enough.
            tm = _round_up(max(n, 8), 8)
    # Shrink until the resident-weight layout fits comfortably in VMEM.
    while tm > 16 and _vmem_estimate(tm, d, c_pad, w_bpe) > _VMEM_SOFT_CAP:
        tm = max(16, tm // 2)
    return tm


def bbox_head_forward(x, fused, *, with_avg_pool=False, tm=None):
    """Forward pass of BBoxHead with pre-fused parameters.

    x:     (N, C, H, W) float32 (H == W == roi_feat_size)
    fused: output of fuse_bbox_head_params()
    Returns (cls_score, bbox_pred) like the PyTorch module.
    """
    if with_avg_pool:
        # nn.AvgPool2d(roi_feat_size) over the full map == global spatial mean
        # (glue, not the hot path).
        x = jnp.mean(x, axis=(2, 3), keepdims=True)

    n = x.shape[0]
    x_flat = x.reshape(n, -1)                 # row-major == torch .view(N, -1)
    d = x_flat.shape[1]

    w = fused["w"]
    b = fused["b"]
    if w.shape[0] != d:
        raise ValueError(f"fused weight D={w.shape[0]} != flattened x D={d}")
    c_pad = w.shape[1]
    w_bpe = jnp.dtype(w.dtype).itemsize

    # TODO(synk): if D ever grows so large that the fused weight
    # (D * c_pad * w_bpe) no longer fits VMEM (not the case for any standard
    # BBoxHead config, e.g. 256*7*7*128*2B = 3.2 MB), add a K-tiled fallback
    # with a resident f32 accumulator.
    tm = _pick_tm(n, d, c_pad, w_bpe, tm)
    m_tiles = pl.cdiv(n, tm)                  # ragged last tile handled by Pallas

    est = _vmem_estimate(tm, d, c_pad, w_bpe)
    vmem_limit = int(min(56 * 1024 * 1024,
                         max(16 * 1024 * 1024, est + (2 << 20))))

    out_pad = pl.pallas_call(
        _bbox_head_fused_kernel,
        out_shape=jax.ShapeDtypeStruct((n, c_pad), jnp.float32),
        grid_spec=pltpu.PrefetchScalarGridSpec(
            num_scalar_prefetch=0,
            grid=(m_tiles,),
            in_specs=[
                pl.BlockSpec((tm, d), lambda m: (m, 0)),       # f32 x tile (no copy)
                pl.BlockSpec((d, c_pad), lambda m: (0, 0)),    # resident fused W
                pl.BlockSpec((1, c_pad), lambda m: (0, 0)),    # resident bias
            ],
            out_specs=pl.BlockSpec((tm, c_pad), lambda m: (m, 0)),
        ),
        compiler_params=pltpu.CompilerParams(
            dimension_semantics=("parallel",),
            vmem_limit_bytes=vmem_limit,
        ),
    )(x_flat, w, b)

    # Split the fused (lane-padded) output back into (cls_score, bbox_pred).
    cls_score = None
    bbox_pred = None
    off = 0
    idx = 0
    widths = fused["widths"]
    if fused["with_cls"]:
        cls_score = out_pad[:, off:off + widths[idx]]
        off += widths[idx]
        idx += 1
    if fused["with_reg"]:
        bbox_pred = out_pad[:, off:off + widths[idx]]
    return cls_score, bbox_pred


def init_bbox_head_params(key, *, in_channels, roi_feat_size, num_classes,
                          reg_class_agnostic=False, with_avg_pool=False):
    """Deterministic parameter init mirroring BBoxHead.init_weights()."""
    d = in_channels if with_avg_pool else in_channels * roi_feat_size * roi_feat_size
    # NOTE: 7 regression outputs per class matches this (3D-box) BBoxHead spec.
    out_reg = 7 if reg_class_agnostic else 7 * num_classes
    k1, k2 = jax.random.split(key)
    return {
        "w_cls": 0.01 * jax.random.normal(k1, (num_classes, d), jnp.float32),
        "b_cls": jnp.zeros((num_classes,), jnp.float32),
        "w_reg": 0.001 * jax.random.normal(k2, (out_reg, d), jnp.float32),
        "b_reg": jnp.zeros((out_reg,), jnp.float32),
    }


if __name__ == "__main__":
    # Small shapes consistent with the module: N RoIs, in_channels,
    # roi_feat_size x roi_feat_size feature map.
    N, C, S = 24, 16, 4            # flattened dim D = 16*4*4 = 256
    NUM_CLASSES = 8                # cls out 8, reg out 7*8 = 56 -> fused 64 -> pad 128
    key = jax.random.PRNGKey(0)
    kx, kp = jax.random.split(key)

    x = jax.random.normal(kx, (N, C, S, S), jnp.float32)
    params = init_bbox_head_params(
        kp, in_channels=C, roi_feat_size=S, num_classes=NUM_CLASSES,
        reg_class_agnostic=False, with_avg_pool=False)

    # Weight fusion / padding / bf16 cast is hoisted: run once, reuse per forward.
    fused_both = fuse_bbox_head_params(params, with_cls=True, with_reg=True)
    fused_cls = fuse_bbox_head_params(params, with_cls=True, with_reg=False)

    # Reference (same math as the PyTorch forward) on bf16-rounded operands.
    x_flat = x.reshape(N, -1)
    xb = x_flat.astype(jnp.bfloat16).astype(jnp.float32)
    wc = params["w_cls"].astype(jnp.bfloat16).astype(jnp.float32)
    wr = params["w_reg"].astype(jnp.bfloat16).astype(jnp.float32)
    ref_cls = jnp.dot(xb, wc.T, precision="highest") + params["b_cls"]
    ref_reg = jnp.dot(xb, wr.T, precision="highest") + params["b_reg"]

    # 1) Default tile sizing (single M tile for this tiny N).
    cls_score, bbox_pred = bbox_head_forward(x, fused_both)
    jax.block_until_ready((cls_score, bbox_pred))
    assert cls_score.shape == (N, NUM_CLASSES)
    assert bbox_pred.shape == (N, 7 * NUM_CLASSES)
    assert jnp.allclose(cls_score, ref_cls, atol=2e-4, rtol=2e-4)
    assert jnp.allclose(bbox_pred, ref_reg, atol=2e-4, rtol=2e-4)

    # 2) Forced tm=16 -> 2 M tiles, the last one ragged (rows 16..23 of 24):
    #    exercises the multi-tile grid and the partial-tile masking path.
    cls_t, reg_t = bbox_head_forward(x, fused_both, tm=16)
    jax.block_until_ready((cls_t, reg_t))
    assert jnp.allclose(cls_t, ref_cls, atol=2e-4, rtol=2e-4)
    assert jnp.allclose(reg_t, ref_reg, atol=2e-4, rtol=2e-4)

    # 3) Single-head path: only the enabled head's weights are fused/computed.
    cls_only, none_reg = bbox_head_forward(x, fused_cls, tm=8)
    jax.block_until_ready(cls_only)
    assert none_reg is None
    assert jnp.allclose(cls_only, ref_cls, atol=2e-4, rtol=2e-4)

    print("KERNEL_OK")
</pallas_src>

<mosaic_0001>
module attributes {stable_mosaic.version = 11 : i64} {
  func.func @_bbox_head_fused_kernel(%arg0: i32, %arg1: memref<24x256xf32, #tpu.memory_space<vmem>>, %arg2: memref<256x128xbf16, #tpu.memory_space<vmem>>, %arg3: memref<1x128xf32, #tpu.memory_space<vmem>>, %arg4: memref<24x128xf32, #tpu.memory_space<vmem>>) attributes {dimension_semantics = [#tpu.dimension_semantics<parallel>], iteration_bounds = array<i64: 1>, scalar_prefetch = 0 : i64, scratch_operands = 0 : i64, tpu.core_type = #tpu.core_type<tc>, window_params = [{transform_indices = @transform_0, window_bounds = array<i64: 24, 256>}, {pipeline_mode = #tpu.pipeline_mode<synchronous>, transform_indices = @transform_1, window_bounds = array<i64: 256, 128>}, {pipeline_mode = #tpu.pipeline_mode<synchronous>, transform_indices = @transform_2, window_bounds = array<i64: 1, 128>}, {transform_indices = @transform_3, window_bounds = array<i64: 24, 128>}]} {
    %c0 = arith.constant 0 : index
    %c0_0 = arith.constant 0 : index
    %0 = vector.load %arg1[%c0, %c0_0] : memref<24x256xf32, #tpu.memory_space<vmem>>, vector<24x256xf32>
    %1 = arith.truncf %0 : vector<24x256xf32> to vector<24x256xbf16>
    %c0_1 = arith.constant 0 : index
    %c0_2 = arith.constant 0 : index
    %2 = vector.load %arg2[%c0_1, %c0_2] : memref<256x128xbf16, #tpu.memory_space<vmem>>, vector<256x128xbf16>
    %cst = arith.constant dense<0.000000e+00> : vector<24x128xf32>
    %3 = tpu.matmul %1, %2, %cst {dimension_numbers = #tpu.dot_dimension_numbers<[1], [0], [0], [1], [0, 0, 1, 1], [], []>} : vector<24x256xbf16>, vector<256x128xbf16>, vector<24x128xf32> -> vector<24x128xf32>
    %c0_3 = arith.constant 0 : index
    %c0_4 = arith.constant 0 : index
    %4 = vector.load %arg3[%c0_3, %c0_4] : memref<1x128xf32, #tpu.memory_space<vmem>>, vector<1x128xf32>
    %5 = vector.broadcast %4 : vector<1x128xf32> to vector<24x128xf32>
    %6 = arith.addf %3, %5 : vector<24x128xf32>
    %c0_5 = arith.constant 0 : index
    %c0_6 = arith.constant 0 : index
    %7 = vector.load %arg4[%c0_5, %c0_6] : memref<24x128xf32, #tpu.memory_space<vmem>>, vector<24x128xf32>
    tpu.vector_store %arg4[%c0_5, %c0_6], %6 {strides = array<i32>} : memref<24x128xf32, #tpu.memory_space<vmem>>, vector<24x128xf32>,
    return
  }
  func.func @transform_0(%arg0: i32) -> (i32, i32) {
    %c0_i32 = arith.constant 0 : i32
    %c0_i32_0 = arith.constant 0 : i32
    return %arg0, %c0_i32 : i32, i32
  }
  func.func @transform_1(%arg0: i32) -> (i32, i32) {
    %c0_i32 = arith.constant 0 : i32
    %c0_i32_0 = arith.constant 0 : i32
    %c0_i32_1 = arith.constant 0 : i32
    return %c0_i32, %c0_i32_0 : i32, i32
  }
  func.func @transform_2(%arg0: i32) -> (i32, i32) {
    %c0_i32 = arith.constant 0 : i32
    %c0_i32_0 = arith.constant 0 : i32
    %c0_i32_1 = arith.constant 0 : i32
    return %c0_i32, %c0_i32_0 : i32, i32
  }
  func.func @transform_3(%arg0: i32) -> (i32, i32) {
    %c0_i32 = arith.constant 0 : i32
    %c0_i32_0 = arith.constant 0 : i32
    return %arg0, %c0_i32 : i32, i32
  }
}

</mosaic_0001>

<llo_original>
// kernel: tpu_custom_call.1
$region0: #{tpu_custom_call.1}
  #allocation0 [shape = 'u32[]', space=smem, size = 0x4, offset = 0x4, fixed_abs, tag = 'smem constant byte address 0x4 - core index']
  #allocation1 [shape = 'u32[144,128]{1,0:T(1,128)}', space=vmem, size = 0x12000, scoped, tag = 'internal scratch']
  %s0 = inlined_call_operand.hbm [shape: f32[24,256], index: 0, kind: input, shape index: {}]
  %s1 = inlined_call_operand.hbm [shape: bf16[256,128], index: 1, kind: input, shape index: {}]
  %s2 = inlined_call_operand.vmem [shape: f32[1,128], index: 2, kind: input, shape index: {}]
  %s3 = inlined_call_operand.hbm [shape: f32[24,128], index: 3, kind: output, shape index: {}]
  %s4 = sld [smem:[#allocation0]]
  $region30: #{tpu_custom_call.1} parent=0
    _
  %s6 = ssub.s32 1, %s4
  %s7 = scalar_select 0, %s6, %s4
  $region1: #{tpu_custom_call.1} parent=0
    #allocation2 [shape = 'u8[24576]{0}', space=vmem, size = 0x6000, scoped, tag = 'input window, operand 0, single buffered']
    #allocation3 [shape = 's32[1]{0}', space=sflag, size = 0x4, scoped, tag = 'scoped memory for tpu_custom_call.1']
    #allocation4 [shape = 's32[1]{0}', space=sflag, size = 0x4, scoped, tag = 'scoped memory for tpu_custom_call.1']
    #allocation5 [shape = 'u8[65536]{0}', space=vmem, size = 0x10000, scoped, tag = 'input window, operand 1, single buffered']
    #allocation6 [shape = 's32[1]{0}', space=sflag, size = 0x4, scoped, tag = 'scoped memory for tpu_custom_call.1']
    #allocation7 [shape = 'u8[12288]{0}', space=vmem, size = 0x3000, scoped, tag = 'output window, operand 0, single buffered']
    %8 = vsyncpa [#allocation3], 0
    %9 = vsyncpa [#allocation6], 0
    %10 = vsyncpa [#allocation4], 0
    // Predicated region
    $region2: #{tpu_custom_call.1} parent=1 // pred_check
      _
    $region3: #{tpu_custom_call.1} parent=1 // pred_check_branch
      %12 = sbr.rel (0) target = $region5
    $region4: #{tpu_custom_call.1} parent=1 // pred_region
      %s14 = ssub.s32 768, 768
      %15 = vsyncadd [#allocation3], %s14
      %s16 = sshll.u32 [#allocation2], 4
      %s17 = int_to_ptr.vmem [resolvable:$true] %s16
      %22 = dma.hbm_to_vmem [thread:$0]  %s0, 768, %s17, [#allocation3], 256, 256, 16
    $region5: #{tpu_custom_call.1} parent=1 // pred_fallthru
      _
    // Predicated region
    $region6: #{tpu_custom_call.1} parent=1 // pred_check
      _
    $region7: #{tpu_custom_call.1} parent=1 // pred_check_branch
      %24 = sbr.rel (0) target = $region9
    $region8: #{tpu_custom_call.1} parent=1 // pred_region
      %s26 = ssub.s32 2048, 2048
      %27 = vsyncadd [#allocation6], %s26
      %s28 = sshll.u32 [#allocation5], 4
      %s29 = int_to_ptr.vmem [resolvable:$true] %s28
      %34 = dma.hbm_to_vmem [thread:$0]  %s1, 2048, %s29, [#allocation6], 64, 64, 4
    $region9: #{tpu_custom_call.1} parent=1 // pred_fallthru
      _
    // Predicated region
    $region10: #{tpu_custom_call.1} parent=1 // pred_check
      _
    $region11: #{tpu_custom_call.1} parent=1 // pred_check_branch
      %36 = sbr.rel (0) target = $region13
    $region12: #{tpu_custom_call.1} parent=1 // pred_region
      _
    $region13: #{tpu_custom_call.1} parent=1 // pred_fallthru
      _
    // Predicated region
    $region14: #{tpu_custom_call.1} parent=1 // pred_check
      _
    $region15: #{tpu_custom_call.1} parent=1 // pred_check_branch
      %38 = sbr.rel (0) target = $region17
    $region16: #{tpu_custom_call.1} parent=1 // pred_region
      %39 = dma.done [#allocation3], 768
    $region17: #{tpu_custom_call.1} parent=1 // pred_fallthru
      _
    // Predicated region
    $region18: #{tpu_custom_call.1} parent=1 // pred_check
      _
    $region19: #{tpu_custom_call.1} parent=1 // pred_check_branch
      %41 = sbr.rel (0) target = $region21
    $region20: #{tpu_custom_call.1} parent=1 // pred_region
      %42 = dma.done [#allocation6], 2048
    $region21: #{tpu_custom_call.1} parent=1 // pred_fallthru
      _
    %v44 = vld [vmem:[#allocation2] sm:$0xff]
    %v45 = vld [vmem:[#allocation2 + $0x8] sm:$0xff]
    %v46 = vld [vmem:[#allocation2 + $0x10] sm:$0xff]
    %v47 = vld [vmem:[#allocation2 + $0x18] sm:$0xff]
    %v48 = vld [vmem:[#allocation2 + $0x20] sm:$0xff]
    %v49 = vld [vmem:[#allocation2 + $0x28] sm:$0xff]
    %v50 = vpack.c.bf16 %v46, %v44
    %v51 = vpack.c.bf16 %v47, %v45
    %v52 = vpack.c.bf16 %v48, %v48
    %v53 = vpack.c.bf16 %v49, %v49
    %v54 = vld [vmem:[#allocation5] sm:$0xf]
    %v55 = vld [vmem:[#allocation5 + $0x4] sm:$0xf]
    %v56 = vld [vmem:[#allocation5 + $0x8] sm:$0xf]
    %v57 = vld [vmem:[#allocation5 + $0xc] sm:$0xf]
    %v58 = vld [vmem:[#allocation5 + $0x10] sm:$0xf]
    %v59 = vld [vmem:[#allocation5 + $0x14] sm:$0xf]
    %v60 = vld [vmem:[#allocation5 + $0x18] sm:$0xf]
    %v61 = vld [vmem:[#allocation5 + $0x1c] sm:$0xf]
    %v62 = vld [vmem:[#allocation5 + $0x20] sm:$0xf]
    %v63 = vld [vmem:[#allocation5 + $0x24] sm:$0xf]
    %v64 = vld [vmem:[#allocation5 + $0x28] sm:$0xf]
    %v65 = vld [vmem:[#allocation5 + $0x2c] sm:$0xf]
    %v66 = vld [vmem:[#allocation5 + $0x30] sm:$0xf]
    %v67 = vld [vmem:[#allocation5 + $0x34] sm:$0xf]
    %v68 = vld [vmem:[#allocation5 + $0x38] sm:$0xf]
    %v69 = vld [vmem:[#allocation5 + $0x3c] sm:$0xf]
    %v70 = vld [vmem:[#allocation5 + $0x40] sm:$0xf]
    %v71 = vld [vmem:[#allocation5 + $0x44] sm:$0xf]
    %v72 = vld [vmem:[#allocation5 + $0x48] sm:$0xf]
    %v73 = vld [vmem:[#allocation5 + $0x4c] sm:$0xf]
    %v74 = vld [vmem:[#allocation5 + $0x50] sm:$0xf]
    %v75 = vld [vmem:[#allocation5 + $0x54] sm:$0xf]
    %v76 = vld [vmem:[#allocation5 + $0x58] sm:$0xf]
    %v77 = vld [vmem:[#allocation5 + $0x5c] sm:$0xf]
    %v78 = vld [vmem:[#allocation5 + $0x60] sm:$0xf]
    %v79 = vld [vmem:[#allocation5 + $0x64] sm:$0xf]
    %v80 = vld [vmem:[#allocation5 + $0x68] sm:$0xf]
    %v81 = vld [vmem:[#allocation5 + $0x6c] sm:$0xf]
    %v82 = vld [vmem:[#allocation5 + $0x70] sm:$0xf]
    %v83 = vld [vmem:[#allocation5 + $0x74] sm:$0xf]
    %v84 = vld [vmem:[#allocation5 + $0x78] sm:$0xf]
    %v85 = vld [vmem:[#allocation5 + $0x7c] sm:$0xf]
    %v86 = vld [vmem:[%s2] sm:$0x1]
    %v88 = vlaneseq
    %v89 = vshrl.u32 %v88, 7
    %v90 = vsub.s32 0, %v89
    %v91 = vrot.slane %v86, %v90
    %v125 = vunpack.c.l.b16 %v54
    %v126 = vunpack.c.l.b16 %v55
    %v127 = vunpack.c.l.b16 %v56
    %v128 = vunpack.c.l.b16 %v57
    %v129 = vunpack.c.l.b16 %v58
    %v130 = vunpack.c.l.b16 %v59
    %v131 = vunpack.c.l.b16 %v60
    %v132 = vunpack.c.l.b16 %v61
    %v133 = vunpack.c.l.b16 %v62
    %v134 = vunpack.c.l.b16 %v63
    %v135 = vunpack.c.l.b16 %v64
    %v136 = vunpack.c.l.b16 %v65
    %v137 = vunpack.c.l.b16 %v66
    %v138 = vunpack.c.l.b16 %v67
    %v139 = vunpack.c.l.b16 %v68
    %v140 = vunpack.c.l.b16 %v69
    %v141 = vunpack.c.l.b16 %v70
    %v142 = vunpack.c.l.b16 %v71
    %v143 = vunpack.c.l.b16 %v72
    %v144 = vunpack.c.l.b16 %v73
    %v145 = vunpack.c.l.b16 %v74
    %v146 = vunpack.c.l.b16 %v75
    %v147 = vunpack.c.l.b16 %v76
    %v148 = vunpack.c.l.b16 %v77
    %v149 = vunpack.c.l.b16 %v78
    %v150 = vunpack.c.l.b16 %v79
    %v151 = vunpack.c.l.b16 %v80
    %v152 = vunpack.c.l.b16 %v81
    %v153 = vunpack.c.l.b16 %v82
    %v154 = vunpack.c.l.b16 %v83
    %v155 = vunpack.c.l.b16 %v84
    %v156 = vunpack.c.l.b16 %v85
    %v157 = vpack.c.b16 %v126, %v125
    %v158 = vpack.c.b16 %v128, %v127
    %v159 = vpack.c.b16 %v130, %v129
    %v160 = vpack.c.b16 %v132, %v131
    %v161 = vpack.c.b16 %v134, %v133
    %v162 = vpack.c.b16 %v136, %v135
    %v163 = vpack.c.b16 %v138, %v137
    %v164 = vpack.c.b16 %v140, %v139
    %v165 = vpack.c.b16 %v142, %v141
    %v166 = vpack.c.b16 %v144, %v143
    %v167 = vpack.c.b16 %v146, %v145
    %v168 = vpack.c.b16 %v148, %v147
    %v169 = vpack.c.b16 %v150, %v149
    %v170 = vpack.c.b16 %v152, %v151
    %v171 = vpack.c.b16 %v154, %v153
    %v172 = vpack.c.b16 %v156, %v155
    %189 = vmatprep.subr.bf16.mxu0 0
    %190 = vmatpush1.bf16.msra.mxu0 %v164
    %191 = vmatprep.subr.bf16.mxu0 0
    %192 = vmatpush1.bf16.msra.mxu0 %v163
    %193 = vmatprep.subr.bf16.mxu0 0
    %194 = vmatpush1.bf16.msra.mxu0 %v162
    %195 = vmatprep.subr.bf16.mxu0 0
    %196 = vmatpush1.bf16.msra.mxu0 %v161
    %197 = vmatprep.subr.bf16.mxu0 0
    %198 = vmatpush1.bf16.msra.mxu0 %v160
    %199 = vmatprep.subr.bf16.mxu0 0
    %200 = vmatpush1.bf16.msra.mxu0 %v159
    %201 = vmatprep.subr.bf16.mxu0 0
    %202 = vmatpush1.bf16.msra.mxu0 %v158
    %203 = vmatprep.subr.bf16.mxu0 0
    %204 = vmatpush1.bf16.msra.mxu0 %v157
    %205 = vmatprep.subr.bf16.mxu0 0
    %206 = vmatpush2.bf16.msra.mxu0 %v172
    %207 = vmatprep.subr.bf16.mxu0 0
    %208 = vmatpush2.bf16.msra.mxu0 %v171
    %209 = vmatprep.subr.bf16.mxu0 0
    %210 = vmatpush2.bf16.msra.mxu0 %v170
    %211 = vmatprep.subr.bf16.mxu0 0
    %212 = vmatpush2.bf16.msra.mxu0 %v169
    %213 = vmatprep.subr.bf16.mxu0 0
    %214 = vmatpush2.bf16.msra.mxu0 %v168
    %215 = vmatprep.subr.bf16.mxu0 0
    %216 = vmatpush2.bf16.msra.mxu0 %v167
    %217 = vmatprep.subr.bf16.mxu0 0
    %218 = vmatpush2.bf16.msra.mxu0 %v166
    %219 = vmatprep.subr.bf16.mxu0 0
    %220 = vmatpush2.bf16.msra.mxu0 %v165
    %221 = vmatprep.mubr.bf16.mxu0 %v51
    %222 = vmatmul.mubr.bf16.gmra.mxu0 %v50
    %v223 = vpop.f32.mrf.mxu0
    %v224 = vadd.f32 %v91, %v223
    %v225 = vpop.f32.mrf.mxu0
    %v226 = vpop.f32.mrf.mxu0
    %v227 = vadd.f32 %v91, %v226
    %v228 = vpop.f32.mrf.mxu0
    %229 = vmatprep.mubr.bf16.mxu0 %v53
    %230 = vmatmul.mubr.bf16.gmra.mxu0 %v52
    %v231 = vpop.f32.mrf.mxu0
    %v232 = vadd.f32 %v91, %v231
    %v233 = vpop.f32.mrf.mxu0
    %v234 = vpop.f32.mrf.mxu0
    %v235 = vpop.f32.mrf.mxu0
    %236 = vdwg.mxu0
    %237 = vst [vmem:[#allocation7] sm:$0xff] %v224
    %238 = vst [vmem:[#allocation7 + $0x8] sm:$0xff] %v227
    %239 = vst [vmem:[#allocation7 + $0x10] sm:$0xff] %v232
    // Predicated region
    $region22: #{tpu_custom_call.1} parent=1 // pred_check
      _
    $region23: #{tpu_custom_call.1} parent=1 // pred_check_branch
      %241 = sbr.rel (0) target = $region25
    $region24: #{tpu_custom_call.1} parent=1 // pred_region
      %s243 = ssub.s32 384, 384
      %244 = vsyncadd [#allocation4], %s243
      %s245 = sshll.u32 [#allocation7], 4
      %s246 = int_to_ptr.vmem [resolvable:$true] %s245
      %251 = dma.vmem_to_hbm [thread:$0]  %s246, 384, %s3, [#allocation4], 128, 128, 8
    $region25: #{tpu_custom_call.1} parent=1 // pred_fallthru
      _
    // Predicated region
    $region26: #{tpu_custom_call.1} parent=1 // pred_check
      _
    $region27: #{tpu_custom_call.1} parent=1 // pred_check_branch
      %253 = sbr.rel (0) target = $region29
    $region28: #{tpu_custom_call.1} parent=1 // pred_region
      %254 = dma.done [#allocation4], 384
    $region29: #{tpu_custom_call.1} parent=1 // pred_fallthru
      _
    %255 = vsyncpa [#allocation3], 1
    %256 = vsyncpa [#allocation6], 1
    %257 = vsyncpa [#allocation4], 1

</llo_original>
